<compile_context>
chip_gen: v5e
topology: v5e:2x2
jax: 0.10.0
libtpu: 0.0.40
codegen_flags: <defaults>
</compile_context>

<pallas_src>
import jax
import jax.numpy as jnp
import numpy as np
from jax.experimental import pallas as pl
from jax.experimental.pallas import tpu as pltpu


def _round_up(a, b):
    return ((a + b - 1) // b) * b


# ----------------------------- Pallas kernels --------------------------------
def _shear_matmul_kernel_k1(kstart_ref, x_ref, st_ref, o_ref):
    # Band fits in a single K block: MXU result goes straight to the output tile.
    o_ref[...] = jnp.dot(x_ref[...], st_ref[...],
                         preferred_element_type=jnp.float32).astype(o_ref.dtype)


def _shear_matmul_kernel(kstart_ref, x_ref, st_ref, o_ref, acc_ref):
    # kstart_ref: SMEM band-start table (used only by the index_maps)
    # x_ref:  (TM, TK) bf16 tile of flattened input
    # st_ref: (TK, TN) bf16 tile of S^T
    # o_ref:  (TM, TN) output tile
    # acc_ref:(TM, TN) f32 accumulator (persists across the K axis)
    k = pl.program_id(2)
    prod = jnp.dot(x_ref[...], st_ref[...], preferred_element_type=jnp.float32)

    @pl.when(k == 0)
    def _():
        acc_ref[...] = prod          # overwrite on first K step (no zero-fill pass)

    @pl.when(k > 0)
    def _():
        acc_ref[...] += prod

    @pl.when(k == pl.num_programs(2) - 1)
    def _():
        o_ref[...] = acc_ref[...].astype(o_ref.dtype)


def _shear_matmul(kstart, x_flat_pad, st_pad, kb, tm, tn, tk, out_dtype,
                  vmem_limit_bytes):
    """out = x_flat_pad @ st_pad, band-restricted over the K axis."""
    nc_p, q_p = x_flat_pad.shape
    _, p_p = st_pad.shape
    ni, nj = nc_p // tm, p_p // tn

    out_bytes = jnp.dtype(out_dtype).itemsize
    x_bytes = jnp.dtype(x_flat_pad.dtype).itemsize
    s_bytes = jnp.dtype(st_pad.dtype).itemsize
    cost = pl.CostEstimate(
        flops=int(2 * nc_p * p_p * kb * tk),
        transcendentals=0,
        bytes_accessed=int(ni * nj * kb * tm * tk * x_bytes
                           + ni * nj * kb * tk * tn * s_bytes
                           + nc_p * p_p * out_bytes))

    if kb == 1:
        grid_spec = pltpu.PrefetchScalarGridSpec(
            num_scalar_prefetch=1,
            grid=(ni, nj),
            in_specs=[
                pl.BlockSpec((tm, tk), lambda i, j, ks: (i, ks[j])),
                pl.BlockSpec((tk, tn), lambda i, j, ks: (ks[j], j)),
            ],
            out_specs=pl.BlockSpec((tm, tn), lambda i, j, ks: (i, j)),
        )
        kernel = _shear_matmul_kernel_k1
        dims = ("parallel", "parallel")
    else:
        grid_spec = pltpu.PrefetchScalarGridSpec(
            num_scalar_prefetch=1,
            grid=(ni, nj, kb),
            in_specs=[
                # x tile: K-block offset by the band start of this output P-tile
                pl.BlockSpec((tm, tk), lambda i, j, k, ks: (i, ks[j] + k)),
                # S^T tile
                pl.BlockSpec((tk, tn), lambda i, j, k, ks: (ks[j] + k, j)),
            ],
            out_specs=pl.BlockSpec((tm, tn), lambda i, j, k, ks: (i, j)),
            scratch_shapes=[pltpu.VMEM((tm, tn), jnp.float32)],
        )
        kernel = _shear_matmul_kernel
        dims = ("parallel", "parallel", "arbitrary")

    return pl.pallas_call(
        kernel,
        out_shape=jax.ShapeDtypeStruct((nc_p, p_p), out_dtype),
        grid_spec=grid_spec,
        cost_estimate=cost,
        compiler_params=pltpu.CompilerParams(
            dimension_semantics=dims,
            vmem_limit_bytes=int(vmem_limit_bytes)),
    )(kstart, x_flat_pad, st_pad)


# ----------------------- sampling-matrix precompute (host) -------------------
def _build_sampling_matrix_np(sx, sy, h, w):
    """Dense bilinear sampling matrix S (P, Q) for F.grid_sample defaults
    (bilinear, zeros padding, align_corners=False) applied to the shear grid."""
    base_x = (2.0 * np.arange(w, dtype=np.float32) + 1.0) / w - 1.0   # (W,)
    base_y = (2.0 * np.arange(h, dtype=np.float32) + 1.0) / h - 1.0   # (H,)
    xg, yg = np.meshgrid(base_x, base_y)                              # (H, W)
    # theta = [[1, sy, 0], [sx, 1, 0]]  ->  gx = x + sy*y ; gy = sx*x + y
    gx = (xg + sy * yg).reshape(-1).astype(np.float32)                # (P,)
    gy = (sx * xg + yg).reshape(-1).astype(np.float32)                # (P,)

    ix = ((gx + 1.0) * w - 1.0) * 0.5
    iy = ((gy + 1.0) * h - 1.0) * 0.5
    ix0 = np.floor(ix)
    iy0 = np.floor(iy)
    fx = ix - ix0
    fy = iy - iy0

    wi = np.arange(w, dtype=np.float32)
    hi = np.arange(h, dtype=np.float32)
    # out-of-bounds neighbors never match an in-range index -> zeros padding
    wx = (np.where(wi[None, :] == ix0[:, None], 1.0 - fx[:, None], 0.0)
          + np.where(wi[None, :] == ix0[:, None] + 1.0, fx[:, None], 0.0))  # (P, W)
    wy = (np.where(hi[None, :] == iy0[:, None], 1.0 - fy[:, None], 0.0)
          + np.where(hi[None, :] == iy0[:, None] + 1.0, fy[:, None], 0.0))  # (P, H)
    S = (wy[:, :, None] * wx[:, None, :]).reshape(h * w, h * w)             # (P, Q)
    return S.astype(np.float32)


def _band_schedule_np(S_pad, tn, tk):
    """Per output P-tile: first K-block with any nonzero S, and the (static) max
    band width in K-blocks.  Blocks outside the band are all-zero, so restricting
    the reduction window to [kstart[j], kstart[j]+kb) is exact."""
    p_p, q_p = S_pad.shape
    nj, nk = p_p // tn, q_p // tk
    klo = np.zeros(nj, dtype=np.int64)
    khi = np.zeros(nj, dtype=np.int64)
    for j in range(nj):
        block = S_pad[j * tn:(j + 1) * tn, :]
        cols = np.nonzero(np.any(block != 0.0, axis=0))[0]
        if cols.size == 0:
            klo[j] = 0
            khi[j] = 0
        else:
            klo[j] = cols[0] // tk
            khi[j] = cols[-1] // tk
    kb = int(max(1, int((khi - klo + 1).max())))
    kstart = np.minimum(klo, nk - kb).astype(np.int32)   # window always in range
    return kstart, kb


# ----------------------------- tile selection ---------------------------------
def _vmem_capacity_bytes():
    try:
        cap = int(pltpu.get_tpu_info().vmem_capacity_bytes)
        if cap > 0:
            return cap
    except Exception:
        pass
    return 64 << 20   # conservative fallback (v7x per-TensorCore)


def _pick_tiles(nc, p, q, out_itemsize, compute_itemsize):
    vmem_cap = _vmem_capacity_bytes()

    # M tile: arithmetic intensity on the dominant S^T stream scales with tm, so go
    # as high as NC allows; for small NC keep native bf16 sublane packing (16 rows).
    if nc >= 512:
        tm = 512
    elif nc >= 256:
        tm = 256
    elif nc >= 128:
        tm = 128
    else:
        tm = _round_up(max(nc, 1), 16)

    tn = min(1024, _round_up(p, 128))
    tk = min(512, _round_up(q, 128))

    def working_set(tm_, tn_, tk_):
        return (2 * tm_ * tk_ * compute_itemsize      # x tiles (double-buffered)
                + 2 * tk_ * tn_ * compute_itemsize    # S^T tiles (double-buffered)
                + 2 * tm_ * tn_ * out_itemsize        # output tiles
                + tm_ * tn_ * 4)                      # f32 accumulator

    budget = int(0.4 * vmem_cap)   # generation-aware headroom (v7x 64 MiB vs 128 MiB)
    while working_set(tm, tn, tk) > budget and tn > 256:
        tn //= 2
    while working_set(tm, tn, tk) > budget and tk > 256:
        tk //= 2
    while working_set(tm, tn, tk) > budget and tm > 128:
        tm //= 2

    nc_p = _round_up(nc, tm)
    p_p = _round_up(p, tn)

    # v7x has 2 TensorCores: guarantee >=2 programs on a parallel axis when possible
    # (harmless on single-core v5e/v6e).
    if nc_p // tm == 1 and p_p // tn == 1 and _round_up(p, 128) >= 256:
        tn = max(128, (tn // 2 // 128) * 128)
        p_p = _round_up(p, tn)

    q_p = _round_up(q, tk)
    vmem_limit = int(min(vmem_cap // 2, max(32 << 20, 4 * working_set(tm, tn, tk))))
    return tm, tn, tk, nc_p, p_p, q_p, vmem_limit


# ----------------------------- Shear module (JAX) ----------------------------
class ShearPallas:
    """JAX/Pallas equivalent of the PyTorch Shear module."""

    def __init__(self, LWC_size, shears, probs, compute_dtype=jnp.bfloat16):
        n, c, h, w = LWC_size
        self.h_out, self.w_out = h, w
        self.shears = list(shears)
        self.probs = list(probs)
        self.compute_dtype = compute_dtype

        nc = n * c
        p = h * w
        q = h * w
        self.nc, self.p, self.q = nc, p, q

        (self.tm, self.tn, self.tk,
         self.nc_p, self.p_p, self.q_p,
         self.vmem_limit) = _pick_tiles(
            nc, p, q, out_itemsize=4,
            compute_itemsize=jnp.dtype(compute_dtype).itemsize)

        # Precompute S^T (padded, bf16) and the band schedule per shear — static per
        # shear, so none of this work is repeated in the forward pass.
        self.st_pads = []
        self.kstarts = []
        self.kbs = []
        for (sx, sy) in self.shears:
            S = _build_sampling_matrix_np(sx, sy, h, w)           # (P, Q) f32
            S_pad = np.zeros((self.p_p, self.q_p), dtype=np.float32)
            S_pad[:p, :q] = S
            kstart, kb = _band_schedule_np(S_pad, self.tn, self.tk)
            self.st_pads.append(jnp.asarray(S_pad.T, dtype=compute_dtype))  # (Qp, Pp)
            self.kstarts.append(jnp.asarray(kstart, dtype=jnp.int32))
            self.kbs.append(kb)

    def select(self, u):
        cumulative = 0.0
        for idx, prob in enumerate(self.probs):
            cumulative += prob
            if cumulative > u:
                return idx
        return None

    def __call__(self, x, u):
        # TODO(synk): the original module draws np.random.uniform inside forward; the
        # draw stays host-side here and is passed in as `u` for determinism.
        idx = self.select(u)
        if idx is None:
            return None  # mirrors the PyTorch module returning None
        n, c, h_in, w_in = x.shape
        nc, q, p = n * c, h_in * w_in, self.h_out * self.w_out
        assert (nc, q) == (self.nc, self.q), "input shape must match LWC_size"

        # reshape + cast fuse into one pass; pad only when the tiles don't divide
        xf = x.reshape(nc, q).astype(self.compute_dtype)
        if (self.nc_p, self.q_p) != (nc, q):
            xf = jnp.pad(xf, ((0, self.nc_p - nc), (0, self.q_p - q)))

        out = _shear_matmul(self.kstarts[idx], xf, self.st_pads[idx], self.kbs[idx],
                            self.tm, self.tn, self.tk, x.dtype, self.vmem_limit)
        if (self.nc_p, self.p_p) != (nc, p):
            out = out[:nc, :p]
        return out.reshape(n, c, self.h_out, self.w_out)


# ----------------------------- reference (plain JAX) -------------------------
def ref_grid_sample(x, sx, sy, h_out, w_out):
    n, c, h_in, w_in = x.shape
    base_x = (2.0 * jnp.arange(w_out, dtype=jnp.float32) + 1.0) / w_out - 1.0
    base_y = (2.0 * jnp.arange(h_out, dtype=jnp.float32) + 1.0) / h_out - 1.0
    xg, yg = jnp.meshgrid(base_x, base_y)
    gx = (xg + sy * yg).reshape(-1)
    gy = (sx * xg + yg).reshape(-1)

    ix = ((gx + 1.0) * w_in - 1.0) * 0.5
    iy = ((gy + 1.0) * h_in - 1.0) * 0.5
    ix0 = jnp.floor(ix)
    iy0 = jnp.floor(iy)
    fx = ix - ix0
    fy = iy - iy0

    def gather(yy, xx):
        valid = (yy >= 0) & (yy <= h_in - 1) & (xx >= 0) & (xx <= w_in - 1)
        yyc = jnp.clip(yy, 0, h_in - 1).astype(jnp.int32)
        xxc = jnp.clip(xx, 0, w_in - 1).astype(jnp.int32)
        vals = x[:, :, yyc, xxc]                     # (N, C, P)
        return jnp.where(valid, vals, 0.0)

    v00 = gather(iy0, ix0)
    v01 = gather(iy0, ix0 + 1)
    v10 = gather(iy0 + 1, ix0)
    v11 = gather(iy0 + 1, ix0 + 1)
    out = (v00 * (1 - fy) * (1 - fx) + v01 * (1 - fy) * fx +
           v10 * fy * (1 - fx) + v11 * fy * fx)
    return out.reshape(n, c, h_out, w_out)


# ----------------------------------- main -------------------------------------
if __name__ == "__main__":
    key = jax.random.PRNGKey(0)
    kx, kr = jax.random.split(key)

    N, C, H, W = 2, 4, 16, 16
    x = jax.random.normal(kx, (N, C, H, W), dtype=jnp.float32)

    # deterministic "parameters" (the module's __init__ args)
    shears = [(0.0, 0.0), (0.2, -0.1), (-0.15, 0.25)]
    probs = [0.3, 0.4, 0.3]

    module = ShearPallas((N, C, H, W), shears, probs)

    # the module draws a uniform random number each forward; make it deterministic
    u = float(jax.random.uniform(kr, ()))

    out = module(x, u)
    out = jax.block_until_ready(out)

    # correctness check against a plain-JAX bilinear grid_sample (f32 reference vs
    # bf16-MXU kernel with f32 accumulation -> tolerance sized for bf16 weights)
    idx = module.select(u)
    sx, sy = shears[idx]
    ref = ref_grid_sample(x, sx, sy, H, W)
    np.testing.assert_allclose(np.asarray(out), np.asarray(ref),
                               rtol=1e-2, atol=5e-2)

    print("KERNEL_OK")
</pallas_src>

<mosaic_0001>
module attributes {stable_mosaic.version = 11 : i64} {
  func.func @_shear_matmul_kernel_k1(%arg0: i32, %arg1: i32, %arg2: memref<2xi32, #tpu.memory_space<smem>>, %arg3: memref<16x256xbf16, #tpu.memory_space<vmem>>, %arg4: memref<256x128xbf16, #tpu.memory_space<vmem>>, %arg5: memref<16x128xf32, #tpu.memory_space<vmem>>) attributes {dimension_semantics = [#tpu.dimension_semantics<parallel>, #tpu.dimension_semantics<parallel>], iteration_bounds = array<i64: 1, 2>, scalar_prefetch = 1 : i64, scratch_operands = 0 : i64, tpu.core_type = #tpu.core_type<tc>, window_params = [{transform_indices = @transform_0, window_bounds = array<i64: 16, 256>}, {transform_indices = @transform_1, window_bounds = array<i64: 256, 128>}, {transform_indices = @transform_2, window_bounds = array<i64: 16, 128>}]} {
    %c0 = arith.constant 0 : index
    %c0_0 = arith.constant 0 : index
    %0 = vector.load %arg3[%c0, %c0_0] : memref<16x256xbf16, #tpu.memory_space<vmem>>, vector<16x256xbf16>
    %c0_1 = arith.constant 0 : index
    %c0_2 = arith.constant 0 : index
    %1 = vector.load %arg4[%c0_1, %c0_2] : memref<256x128xbf16, #tpu.memory_space<vmem>>, vector<256x128xbf16>
    %cst = arith.constant dense<0.000000e+00> : vector<16x128xf32>
    %2 = tpu.matmul %0, %1, %cst {dimension_numbers = #tpu.dot_dimension_numbers<[1], [0], [0], [1], [0, 0, 1, 1], [], []>} : vector<16x256xbf16>, vector<256x128xbf16>, vector<16x128xf32> -> vector<16x128xf32>
    %c0_3 = arith.constant 0 : index
    %c0_4 = arith.constant 0 : index
    %3 = vector.load %arg5[%c0_3, %c0_4] : memref<16x128xf32, #tpu.memory_space<vmem>>, vector<16x128xf32>
    tpu.vector_store %arg5[%c0_3, %c0_4], %2 {strides = array<i32>} : memref<16x128xf32, #tpu.memory_space<vmem>>, vector<16x128xf32>,
    return
  }
  func.func @transform_0(%arg0: i32, %arg1: i32, %arg2: memref<2xi32, #tpu.memory_space<smem>>) -> (i32, i32) {
    %0 = arith.index_cast %arg1 : i32 to index
    %1 = memref.load %arg2[%0] : memref<2xi32, #tpu.memory_space<smem>>
    %c0_i32 = arith.constant 0 : i32
    return %arg0, %1 : i32, i32
  }
  func.func @transform_1(%arg0: i32, %arg1: i32, %arg2: memref<2xi32, #tpu.memory_space<smem>>) -> (i32, i32) {
    %0 = arith.index_cast %arg1 : i32 to index
    %1 = memref.load %arg2[%0] : memref<2xi32, #tpu.memory_space<smem>>
    %c0_i32 = arith.constant 0 : i32
    return %1, %arg1 : i32, i32
  }
  func.func @transform_2(%arg0: i32, %arg1: i32, %arg2: memref<2xi32, #tpu.memory_space<smem>>) -> (i32, i32) {
    %c0_i32 = arith.constant 0 : i32
    return %arg0, %arg1 : i32, i32
  }
}

</mosaic_0001>

<llo_original>
// kernel: tpu_custom_call.1
$region0: #{tpu_custom_call.1}
  #allocation0 [shape = 'u32[]', space=smem, size = 0x4, offset = 0x4, fixed_abs, tag = 'smem constant byte address 0x4 - core index']
  #allocation1 [shape = 'u32[72,128]{1,0:T(1,128)}', space=vmem, size = 0x9000, scoped, tag = 'internal scratch']
  #allocation2 [shape = 's32[1]{0}', space=sflag, size = 0x4, scoped, tag = 'scoped memory for tpu_custom_call.1']
  #allocation3 [shape = 'u8[512]{0}', space=smem, size = 0x200, scoped, tag = 'prefetched SMEM operand 0']
  %s0 = inlined_call_operand.hbm [shape: s32[2], index: 0, kind: input, shape index: {}]
  %s1 = inlined_call_operand.hbm [shape: bf16[16,256], index: 1, kind: input, shape index: {}]
  %s2 = inlined_call_operand.hbm [shape: bf16[256,256], index: 2, kind: input, shape index: {}]
  %s3 = inlined_call_operand.hbm [shape: f32[16,256], index: 3, kind: output, shape index: {}]
  %s4 = sld [smem:[#allocation0]]
  $region49: #{tpu_custom_call.1} parent=0
    _
  %s6 = ssub.s32 1, %s4
  %s7 = scalar_select 0, %s6, %s4
  %s9 = sshll.u32 %s0, 4
  %s10 = int_to_ptr.hbm [resolvable:$true] %s9
  %12 = dma.hbm_to_smem %s10, 16, [#allocation3], [#allocation2]
  %14 = dma.done [#allocation2], 16
  %15 = sfence
  $region1: #{tpu_custom_call.1} parent=0
    #allocation4 [shape = 'u8[16384]{0}', space=vmem, size = 0x4000, scoped, tag = 'input window, operand 1']
    #allocation5 [shape = 's32[2]{0}', space=sflag, size = 0x8, scoped, tag = 'scoped memory for tpu_custom_call.1']
    #allocation6 [shape = 's32[2]{0}', space=sflag, size = 0x8, scoped, tag = 'scoped memory for tpu_custom_call.1']
    #allocation7 [shape = 'u8[131072]{0}', space=vmem, size = 0x20000, scoped, tag = 'input window, operand 2']
    #allocation8 [shape = 's32[2]{0}', space=sflag, size = 0x8, scoped, tag = 'scoped memory for tpu_custom_call.1']
    #allocation9 [shape = 'u8[16384]{0}', space=vmem, size = 0x4000, scoped, tag = 'output window, operand 0']
    %16 = vsyncpa [#allocation5], 0
    %s17 = scalar_lea.sflag [#allocation5], 1
    %18 = vsyncpa %s17, 0
    %19 = vsyncpa [#allocation8], 0
    %s20 = scalar_lea.sflag [#allocation8], 1
    %21 = vsyncpa %s20, 0
    %22 = vsyncpa [#allocation6], 0
    %s23 = scalar_lea.sflag [#allocation6], 1
    %24 = vsyncpa %s23, 0
    loop: start=0, step=1, limit=4
    $region2: #{tpu_custom_call.1} parent=1 // loop_pre_header
      _
    $region3: #{tpu_custom_call.1} parent=1 // loop_header
      %s26 = sphi 0, %s30
      %p27 = scmp.ge.s32.totalorder %s26, 4
      %s33 = sphi 0, %s45
      %s34 = sphi 0, %s41
      %s35 = sphi 0, %s33
      %s36 = sphi 0, %s34
      %s37 = sphi 0, %s35
      %s38 = sphi 0, %s36
      %s52 = sphi 0, %s54
      %s55 = sphi 0, %s52
      %s56 = sphi 0, %s55
      %s72 = sphi 0, %s56
      %s82 = sphi 0, %s84
      %s85 = sphi 0, %s82
      %s86 = sphi 0, %s85
      %s102 = sphi 0, %s86
      %s110 = sphi 0, %s112
      %s113 = sphi 0, %s110
      %s114 = sphi 0, %s113
      %s130 = sphi 0, %s114
    $region4: #{tpu_custom_call.1} parent=1 // loop_header_branch
      %29 = sbr.rel (%p27) target = $region8
    $region5: #{tpu_custom_call.1} parent=1 // loop_body
      %s31 = ssub.s32 %s26, 1
      %s32 = ssub.s32 %s26, 2
      %s39 = sadd.s32 1, %s34
      %p40 = scmp.ge.s32.totalorder %s39, 2
      %s41 = scalar_select %p40, 0, %s39
      %s42 = sadd.s32 1, %s33
      %s43 = scalar_select %p40, %s42, %s33
      %p44 = scmp.ge.s32.totalorder %s43, 1
      %s45 = scalar_select %p44, 0, %s43
      %s46 = sld [smem:[#allocation3 + %s34]]
      %s47 = sld [smem:[#allocation3 + %s41]]
      %s48 = ssub.s32 %s33, %s45
      %s49 = ssub.s32 %s46, %s47
      %s50 = sor.u32 %s48, %s49
      %p51 = scmp.eq.s32.totalorder %s50, 0
      %s53 = sadd.s32 %s52, 1
      %s54 = scalar_select %p51, %s52, %s53
      %p57 = pneg %p51
      %p58 = scmp.eq.s32.totalorder %s26, 1
      %p59 = por %p57, %p58
      %p60 = scmp.ne.s32.totalorder %s52, %s55
      %p61 = scmp.eq.s32.totalorder %s26, 0
      %p62 = por %p60, %p61
      %p63 = scmp.ne.s32.totalorder %s52, %s55
      %p64 = scmp.eq.s32.totalorder %s31, 1
      %p65 = por %p63, %p64
      %p66 = scmp.ne.s32.totalorder %s55, %s56
      %p67 = scmp.eq.s32.totalorder %s31, 0
      %p68 = por %p66, %p67
      %p69 = scmp.ne.s32.totalorder %s55, %s56
      %p70 = scmp.eq.s32.totalorder %s32, 1
      %p71 = por %p69, %p70
      %p73 = scmp.ne.s32.totalorder %s56, %s72
      %p74 = scmp.eq.s32.totalorder %s32, 0
      %p75 = por %p73, %p74
      %s76 = sld [smem:[#allocation3 + %s34]]
      %s77 = sld [smem:[#allocation3 + %s41]]
      %s78 = ssub.s32 %s76, %s77
      %s79 = ssub.s32 %s34, %s41
      %s80 = sor.u32 %s78, %s79
      %p81 = scmp.eq.s32.totalorder %s80, 0
      %s83 = sadd.s32 %s82, 1
      %s84 = scalar_select %p81, %s82, %s83
      %p87 = pneg %p81
      %p88 = scmp.eq.s32.totalorder %s26, 1
      %p89 = por %p87, %p88
      %p90 = scmp.ne.s32.totalorder %s82, %s85
      %p91 = scmp.eq.s32.totalorder %s26, 0
      %p92 = por %p90, %p91
      %p93 = scmp.ne.s32.totalorder %s82, %s85
      %p94 = scmp.eq.s32.totalorder %s31, 1
      %p95 = por %p93, %p94
      %p96 = scmp.ne.s32.totalorder %s85, %s86
      %p97 = scmp.eq.s32.totalorder %s31, 0
      %p98 = por %p96, %p97
      %p99 = scmp.ne.s32.totalorder %s85, %s86
      %p100 = scmp.eq.s32.totalorder %s32, 1
      %p101 = por %p99, %p100
      %p103 = scmp.ne.s32.totalorder %s86, %s102
      %p104 = scmp.eq.s32.totalorder %s32, 0
      %p105 = por %p103, %p104
      %s106 = ssub.s32 %s33, %s45
      %s107 = ssub.s32 %s34, %s41
      %s108 = sor.u32 %s106, %s107
      %p109 = scmp.eq.s32.totalorder %s108, 0
      %s111 = sadd.s32 %s110, 1
      %s112 = scalar_select %p109, %s110, %s111
      %p115 = pneg %p109
      %p116 = scmp.eq.s32.totalorder %s26, 1
      %p117 = por %p115, %p116
      %p118 = scmp.ne.s32.totalorder %s110, %s113
      %p119 = scmp.eq.s32.totalorder %s26, 0
      %p120 = por %p118, %p119
      %p121 = scmp.ne.s32.totalorder %s110, %s113
      %p122 = scmp.eq.s32.totalorder %s31, 1
      %p123 = por %p121, %p122
      %p124 = scmp.ne.s32.totalorder %s113, %s114
      %p125 = scmp.eq.s32.totalorder %s31, 0
      %p126 = por %p124, %p125
      %p127 = scmp.ne.s32.totalorder %s113, %s114
      %p128 = scmp.eq.s32.totalorder %s32, 1
      %p129 = por %p127, %p128
      %p131 = scmp.ne.s32.totalorder %s114, %s130
      %p132 = scmp.eq.s32.totalorder %s32, 0
      %p133 = por %p131, %p132
      %p134 = scmp.le.s32.totalorder 1, %s26
      %p135 = scmp.lt.s32.totalorder %s26, 3
      %p136 = pnand %p134, %p135
      %p137 = pneg %p136
      // Predicated region
      $region9: #{tpu_custom_call.1} parent=5 // pred_check
        _
      $region10: #{tpu_custom_call.1} parent=5 // pred_check_branch
        %139 = sbr.rel (%p136) target = $region12
      $region11: #{tpu_custom_call.1} parent=5 // pred_region
        %s140 = ssub.s32 %s26, 1
      $region12: #{tpu_custom_call.1} parent=5 // pred_fallthru
        _
      %p141 = scmp.lt.s32.totalorder %s26, 2
      // Predicated region
      $region13: #{tpu_custom_call.1} parent=5 // pred_check
        %p142 = pneg %p141
      $region14: #{tpu_custom_call.1} parent=5 // pred_check_branch
        %144 = sbr.rel (%p142) target = $region16
      $region15: #{tpu_custom_call.1} parent=5 // pred_region
        // Predicated region
        $region17: #{tpu_custom_call.1} parent=15 // pred_check
          %p145 = pneg %p62
        $region18: #{tpu_custom_call.1} parent=15 // pred_check_branch
          %147 = sbr.rel (%p145) target = $region20
        $region19: #{tpu_custom_call.1} parent=15 // pred_region
          %s148 = sand.u32 %s52, 1
          %s149 = scalar_lea.sflag [#allocation5], %s148
          %s150 = sand.u32 %s52, 1
          %s151 = smul.addr %s150, 16
          %s152 = scalar_lea.vmem [#allocation4], %s151
          %s153 = sld [smem:[#allocation3 + %s34]]
          %s154 = smul.u32 2, %s33
          %s155 = smul.u32 2, %s153
          %157 = vsyncadd %s149, 0
          %s158 = smul.addr %s154, 2
          %s159 = sadd.s32 %s155, %s158
          %s160 = smul.addr %s159, 4
          %s161 = scalar_lea.hbm %s1, %s160
          %s162 = sshll.u32 %s161, 4
          %s163 = int_to_ptr.hbm [resolvable:$true] %s162
          %s164 = sshll.u32 %s152, 4
          %s165 = int_to_ptr.vmem [resolvable:$true] %s164
          %170 = dma.hbm_to_vmem [thread:$0]  %s163, 256, %s165, %s149, 128, 128, 8
        $region20: #{tpu_custom_call.1} parent=15 // pred_fallthru
          _
        // Predicated region
        $region21: #{tpu_custom_call.1} parent=15 // pred_check
          %p171 = pneg %p92
        $region22: #{tpu_custom_call.1} parent=15 // pred_check_branch
          %173 = sbr.rel (%p171) target = $region24
        $region23: #{tpu_custom_call.1} parent=15 // pred_region
          %s174 = sand.u32 %s82, 1
          %s175 = scalar_lea.sflag [#allocation8], %s174
          %s176 = sand.u32 %s82, 1
          %s177 = smul.addr %s176, 128
          %s178 = scalar_lea.vmem [#allocation7], %s177
          %s179 = sld [smem:[#allocation3 + %s34]]
          %s180 = smul.u32 32, %s179
          %182 = vsyncadd %s175, 0
          %s183 = smul.addr %s180, 2
          %s184 = sadd.s32 %s34, %s183
          %s185 = smul.addr %s184, 4
          %s186 = scalar_lea.hbm %s2, %s185
          %s187 = sshll.u32 %s186, 4
          %s188 = int_to_ptr.hbm [resolvable:$true] %s187
          %s189 = sshll.u32 %s178, 4
          %s190 = int_to_ptr.vmem [resolvable:$true] %s189
          %195 = dma.hbm_to_vmem [thread:$0]  %s188, 2048, %s190, %s175, 128, 64, 4
        $region24: #{tpu_custom_call.1} parent=15 // pred_fallthru
          _
      $region16: #{tpu_custom_call.1} parent=5 // pred_fallthru
        _
      %p196 = scmp.le.s32.totalorder 1, %s26
      %p197 = scmp.lt.s32.totalorder %s26, 3
      %p198 = pnand %p196, %p197
      %p199 = pneg %p198
      // Predicated region
      $region25: #{tpu_custom_call.1} parent=5 // pred_check
        _
      $region26: #{tpu_custom_call.1} parent=5 // pred_check_branch
        %201 = sbr.rel (%p198) target = $region28
      $region27: #{tpu_custom_call.1} parent=5 // pred_region
        %s202 = ssub.s32 %s26, 1
        %s203 = sand.u32 %s55, 1
        %s204 = scalar_lea.sflag [#allocation5], %s203
        %s205 = sand.u32 %s55, 1
        %s206 = smul.addr %s205, 16
        %s207 = scalar_lea.vmem [#allocation4], %s206
        // Predicated region
        $region29: #{tpu_custom_call.1} parent=27 // pred_check
          %p208 = pneg %p68
        $region30: #{tpu_custom_call.1} parent=27 // pred_check_branch
          %210 = sbr.rel (%p208) target = $region32
        $region31: #{tpu_custom_call.1} parent=27 // pred_region
          %212 = dma.done %s204, 256
        $region32: #{tpu_custom_call.1} parent=27 // pred_fallthru
          _
        %s213 = sand.u32 %s85, 1
        %s214 = scalar_lea.sflag [#allocation8], %s213
        %s215 = sand.u32 %s85, 1
        %s216 = smul.addr %s215, 128
        %s217 = scalar_lea.vmem [#allocation7], %s216
        // Predicated region
        $region33: #{tpu_custom_call.1} parent=27 // pred_check
          %p218 = pneg %p98
        $region34: #{tpu_custom_call.1} parent=27 // pred_check_branch
          %220 = sbr.rel (%p218) target = $region36
        $region35: #{tpu_custom_call.1} parent=27 // pred_region
          %222 = dma.done %s214, 2048
        $region36: #{tpu_custom_call.1} parent=27 // pred_fallthru
          _
        %s223 = sand.u32 %s55, 1
        %s224 = scalar_lea.sflag [#allocation5], %s223
        %s225 = sand.u32 %s55, 1
        %s226 = smul.addr %s225, 16
        %s227 = scalar_lea.vmem [#allocation4], %s226
        %p228 = pneg %p68
        %p229 = pneg %p65
        %s230 = sand.u32 %s85, 1
        %s231 = scalar_lea.sflag [#allocation8], %s230
        %s232 = sand.u32 %s85, 1
        %s233 = smul.addr %s232, 128
        %s234 = scalar_lea.vmem [#allocation7], %s233
        %p235 = pneg %p98
        %p236 = pneg %p95
        %p237 = pneg %p126
        %p238 = pneg %p123
        %s239 = sand.u32 %s113, 1
        %s240 = scalar_lea.sflag [#allocation6], %s239
        %s241 = sand.u32 %s113, 1
        %s242 = smul.addr %s241, 16
        %s243 = scalar_lea.vmem [#allocation9], %s242
        %s244 = sld [smem:[#allocation3 + %s36]]
        %s245 = smul.u32 2, %s35
        %s246 = smul.u32 2, %s244
        %s247 = sld [smem:[#allocation3 + %s36]]
        %s248 = smul.u32 32, %s247
        %s249 = smul.u32 2, %s35
        %v250 = vld [vmem:[%s207] sm:$0xff]
        %v251 = vld [vmem:[%s207 + $0x8] sm:$0xff]
        %v252 = vld [vmem:[%s217] sm:$0xf]
        %v253 = vld [vmem:[%s217 + $0x4] sm:$0xf]
        %v254 = vld [vmem:[%s217 + $0x8] sm:$0xf]
        %v255 = vld [vmem:[%s217 + $0xc] sm:$0xf]
        %v256 = vld [vmem:[%s217 + $0x10] sm:$0xf]
        %v257 = vld [vmem:[%s217 + $0x14] sm:$0xf]
        %v258 = vld [vmem:[%s217 + $0x18] sm:$0xf]
        %v259 = vld [vmem:[%s217 + $0x1c] sm:$0xf]
        %v260 = vld [vmem:[%s217 + $0x20] sm:$0xf]
        %v261 = vld [vmem:[%s217 + $0x24] sm:$0xf]
        %v262 = vld [vmem:[%s217 + $0x28] sm:$0xf]
        %v263 = vld [vmem:[%s217 + $0x2c] sm:$0xf]
        %v264 = vld [vmem:[%s217 + $0x30] sm:$0xf]
        %v265 = vld [vmem:[%s217 + $0x34] sm:$0xf]
        %v266 = vld [vmem:[%s217 + $0x38] sm:$0xf]
        %v267 = vld [vmem:[%s217 + $0x3c] sm:$0xf]
        %v268 = vld [vmem:[%s217 + $0x40] sm:$0xf]
        %v269 = vld [vmem:[%s217 + $0x44] sm:$0xf]
        %v270 = vld [vmem:[%s217 + $0x48] sm:$0xf]
        %v271 = vld [vmem:[%s217 + $0x4c] sm:$0xf]
        %v272 = vld [vmem:[%s217 + $0x50] sm:$0xf]
        %v273 = vld [vmem:[%s217 + $0x54] sm:$0xf]
        %v274 = vld [vmem:[%s217 + $0x58] sm:$0xf]
        %v275 = vld [vmem:[%s217 + $0x5c] sm:$0xf]
        %v276 = vld [vmem:[%s217 + $0x60] sm:$0xf]
        %v277 = vld [vmem:[%s217 + $0x64] sm:$0xf]
        %v278 = vld [vmem:[%s217 + $0x68] sm:$0xf]
        %v279 = vld [vmem:[%s217 + $0x6c] sm:$0xf]
        %v280 = vld [vmem:[%s217 + $0x70] sm:$0xf]
        %v281 = vld [vmem:[%s217 + $0x74] sm:$0xf]
        %v282 = vld [vmem:[%s217 + $0x78] sm:$0xf]
        %v283 = vld [vmem:[%s217 + $0x7c] sm:$0xf]
        %v286 = vunpack.c.l.b16 %v250
        %v287 = vunpack.c.h.b16 %v250
        %v288 = vunpack.c.l.b16 %v251
        %v289 = vunpack.c.h.b16 %v251
        %v290 = vpack.c.b16 %v288, %v286
        %v291 = vpack.c.b16 %v289, %v287
        %v326 = vunpack.c.l.b16 %v252
        %v327 = vunpack.c.l.b16 %v253
        %v328 = vunpack.c.l.b16 %v254
        %v329 = vunpack.c.l.b16 %v255
        %v330 = vunpack.c.l.b16 %v256
        %v331 = vunpack.c.l.b16 %v257
        %v332 = vunpack.c.l.b16 %v258
        %v333 = vunpack.c.l.b16 %v259
        %v334 = vunpack.c.l.b16 %v260
        %v335 = vunpack.c.l.b16 %v261
        %v336 = vunpack.c.l.b16 %v262
        %v337 = vunpack.c.l.b16 %v263
        %v338 = vunpack.c.l.b16 %v264
        %v339 = vunpack.c.l.b16 %v265
        %v340 = vunpack.c.l.b16 %v266
        %v341 = vunpack.c.l.b16 %v267
        %v342 = vunpack.c.l.b16 %v268
        %v343 = vunpack.c.l.b16 %v269
        %v344 = vunpack.c.l.b16 %v270
        %v345 = vunpack.c.l.b16 %v271
        %v346 = vunpack.c.l.b16 %v272
        %v347 = vunpack.c.l.b16 %v273
        %v348 = vunpack.c.l.b16 %v274
        %v349 = vunpack.c.l.b16 %v275
        %v350 = vunpack.c.l.b16 %v276
        %v351 = vunpack.c.l.b16 %v277
        %v352 = vunpack.c.l.b16 %v278
        %v353 = vunpack.c.l.b16 %v279
        %v354 = vunpack.c.l.b16 %v280
        %v355 = vunpack.c.l.b16 %v281
        %v356 = vunpack.c.l.b16 %v282
        %v357 = vunpack.c.l.b16 %v283
        %v358 = vpack.c.b16 %v327, %v326
        %v359 = vpack.c.b16 %v329, %v328
        %v360 = vpack.c.b16 %v331, %v330
        %v361 = vpack.c.b16 %v333, %v332
        %v362 = vpack.c.b16 %v335, %v334
        %v363 = vpack.c.b16 %v337, %v336
        %v364 = vpack.c.b16 %v339, %v338
        %v365 = vpack.c.b16 %v341, %v340
        %v366 = vpack.c.b16 %v343, %v342
        %v367 = vpack.c.b16 %v345, %v344
        %v368 = vpack.c.b16 %v347, %v346
        %v369 = vpack.c.b16 %v349, %v348
        %v370 = vpack.c.b16 %v351, %v350
        %v371 = vpack.c.b16 %v353, %v352
        %v372 = vpack.c.b16 %v355, %v354
        %v373 = vpack.c.b16 %v357, %v356
        %390 = vmatpush.bf16.msra.mxu0 %v365
        %391 = vmatpush.bf16.msra.mxu0 %v364
        %392 = vmatpush.bf16.msra.mxu0 %v363
        %393 = vmatpush.bf16.msra.mxu0 %v362
        %394 = vmatpush.bf16.msra.mxu0 %v361
        %395 = vmatpush.bf16.msra.mxu0 %v360
        %396 = vmatpush.bf16.msra.mxu0 %v359
        %397 = vmatpush.bf16.msra.mxu0 %v358
        %398 = vmatmul.bf16.gmra.mxu0 %v290
        %v399 = vpop.f32.mrf.mxu0
        %v400 = vadd.f32 0.0, %v399
        %v401 = vpop.f32.mrf.mxu0
        %v402 = vadd.f32 0.0, %v401
        %403 = vdwg.mxu0
        %404 = vmatpush.bf16.msra.mxu0 %v373
        %405 = vmatpush.bf16.msra.mxu0 %v372
        %406 = vmatpush.bf16.msra.mxu0 %v371
        %407 = vmatpush.bf16.msra.mxu0 %v370
        %408 = vmatpush.bf16.msra.mxu0 %v369
        %409 = vmatpush.bf16.msra.mxu0 %v368
        %410 = vmatpush.bf16.msra.mxu0 %v367
        %411 = vmatpush.bf16.msra.mxu0 %v366
        %412 = vmatmul.bf16.gmra.mxu0 %v291
        %v413 = vpop.f32.mrf.mxu0
        %v414 = vadd.f32 %v400, %v413
        %v415 = vpop.f32.mrf.mxu0
        %v416 = vadd.f32 %v402, %v415
        %417 = vdwg.mxu0
        %418 = vst [vmem:[%s243] sm:$0xff] %v414
        %419 = vst [vmem:[%s243 + $0x8] sm:$0xff] %v416
        %s420 = sand.u32 %s113, 1
        %s421 = scalar_lea.sflag [#allocation6], %s420
        %s422 = sand.u32 %s113, 1
        %s423 = smul.addr %s422, 16
        %s424 = scalar_lea.vmem [#allocation9], %s423
        // Predicated region
        $region37: #{tpu_custom_call.1} parent=27 // pred_check
          %p425 = pneg %p123
        $region38: #{tpu_custom_call.1} parent=27 // pred_check_branch
          %427 = sbr.rel (%p425) target = $region40
        $region39: #{tpu_custom_call.1} parent=27 // pred_region
          %s428 = smul.u32 2, %s35
          %430 = vsyncadd %s421, 0
          %s431 = smul.addr %s428, 2
          %s432 = sadd.s32 %s36, %s431
          %s433 = smul.addr %s432, 8
          %s434 = scalar_lea.hbm %s3, %s433
          %s435 = sshll.u32 %s424, 4
          %s436 = int_to_ptr.vmem [resolvable:$true] %s435
          %s437 = sshll.u32 %s434, 4
          %s438 = int_to_ptr.hbm [resolvable:$true] %s437
          %443 = dma.vmem_to_hbm [thread:$0]  %s436, 256, %s438, %s421, 128, 256, 8
        $region40: #{tpu_custom_call.1} parent=27 // pred_fallthru
          _
      $region28: #{tpu_custom_call.1} parent=5 // pred_fallthru
        _
      %p444 = scmp.le.s32.totalorder 2, %s26
      // Predicated region
      $region41: #{tpu_custom_call.1} parent=5 // pred_check
        %p445 = pneg %p444
      $region42: #{tpu_custom_call.1} parent=5 // pred_check_branch
        %447 = sbr.rel (%p445) target = $region44
      $region43: #{tpu_custom_call.1} parent=5 // pred_region
        %s448 = ssub.s32 %s26, 2
        // Predicated region
        $region45: #{tpu_custom_call.1} parent=43 // pred_check
          %p449 = pneg %p129
        $region46: #{tpu_custom_call.1} parent=43 // pred_check_branch
          %451 = sbr.rel (%p449) target = $region48
        $region47: #{tpu_custom_call.1} parent=43 // pred_region
          %s452 = sand.u32 %s114, 1
          %s453 = scalar_lea.sflag [#allocation6], %s452
          %s454 = sand.u32 %s114, 1
          %s455 = smul.addr %s454, 16
          %s456 = scalar_lea.vmem [#allocation9], %s455
          %458 = dma.done %s453, 256
        $region48: #{tpu_custom_call.1} parent=43 // pred_fallthru
          _
      $region44: #{tpu_custom_call.1} parent=5 // pred_fallthru
        _
    $region6: #{tpu_custom_call.1} parent=1 // loop_footer
      %s30 = sadd.s32 1, %s26
    $region7: #{tpu_custom_call.1} parent=1 // loop_footer_branch
      %25 = sbr.rel target = $region3
    $region8: #{tpu_custom_call.1} parent=1 // loop_exit
      _
    %459 = vsyncpa [#allocation5], 1
    %s460 = scalar_lea.sflag [#allocation5], 1
    %461 = vsyncpa %s460, 1
    %462 = vsyncpa [#allocation8], 1
    %s463 = scalar_lea.sflag [#allocation8], 1
    %464 = vsyncpa %s463, 1
    %465 = vsyncpa [#allocation6], 1
    %s466 = scalar_lea.sflag [#allocation6], 1
    %467 = vsyncpa %s466, 1

</llo_original>
